<compile_context>
chip_gen: v6e
topology: v6e:2x2x1
jax: 0.10.0
libtpu: 0.0.40
codegen_flags: <defaults>
</compile_context>

<pallas_src>
import jax
import jax.numpy as jnp
from jax.experimental import pallas as pl
from jax.experimental.pallas import tpu as pltpu

_LANE = 128
_SUBLANE = 8
_DEFAULT_SCOPED_VMEM = 16 * 1024 * 1024   # most conservative default scoped limit (v5e)
_MAX_VMEM_LIMIT = 64 * 1024 * 1024        # safe ceiling on all generations (v7x physical = 64 MiB)


def _round_up(x, m):
    return (x + m - 1) // m * m


def _swish(x):
    return x * jax.nn.sigmoid(x)


def _softplus(x):
    # Matches torch.nn.Softplus(beta=1, threshold=20); single-exp stable form.
    sp = jnp.maximum(x, 0.0) + jnp.log1p(jnp.exp(-jnp.abs(x)))
    return jnp.where(x > 20.0, x, sp)


def mlp_kernel(x_ref, w1_ref, b1_ref, w2_ref, b2_ref, w3_ref, b3_ref, o_ref):
    # Hidden layer 1: Linear + Swish (f32 accumulation on the MXU).
    h = jnp.dot(x_ref[...], w1_ref[...], preferred_element_type=jnp.float32) + b1_ref[...]
    h = _swish(h)
    # Hidden layer 2: Linear + Swish.
    h = jnp.dot(h.astype(w2_ref.dtype), w2_ref[...], preferred_element_type=jnp.float32) + b2_ref[...]
    h = _swish(h)
    # Final layer: Linear + Softplus.
    y = jnp.dot(h.astype(w3_ref.dtype), w3_ref[...], preferred_element_type=jnp.float32) + b3_ref[...]
    o_ref[...] = _softplus(y).astype(o_ref.dtype)


def prepare_params(params, *, compute_dtype=jnp.float32):
    """Transpose to [in, out], pad to lane multiples, and cast ONCE (hoisted out of the hot path).

    params: dict of (W, b) per layer in PyTorch layout W:[out, in], b:[out].
    """
    (w1, b1), (w2, b2), (w3, b3) = params["l1"], params["l2"], params["l3"]
    Din, H1, H2, Dout = int(w1.shape[1]), int(w1.shape[0]), int(w2.shape[0]), int(w3.shape[0])
    Dinp, H1p, H2p, Doutp = (_round_up(d, _LANE) for d in (Din, H1, H2, Dout))

    def pad_t(w, rows, cols):
        wt = w.T.astype(compute_dtype)
        return jnp.zeros((rows, cols), compute_dtype).at[: wt.shape[0], : wt.shape[1]].set(wt)

    def pad_b(b, cols):
        return jnp.zeros((1, cols), jnp.float32).at[0, : b.shape[0]].set(b.astype(jnp.float32))

    return dict(
        w1=pad_t(w1, Dinp, H1p), b1=pad_b(b1, H1p),
        w2=pad_t(w2, H1p, H2p), b2=pad_b(b2, H2p),
        w3=pad_t(w3, H2p, Doutp), b3=pad_b(b3, Doutp),
        dims=(Din, H1, H2, Dout),
        padded_dims=(Dinp, H1p, H2p, Doutp),
        compute_dtype=compute_dtype,
    )


def feedforward_nn_pallas(x, prepared, *, batch_tile=None):
    """x: [B, in_dim]. `prepared` from prepare_params (padded/transposed weights)."""
    Din, H1, H2, Dout = prepared["dims"]
    Dinp, H1p, H2p, Doutp = prepared["padded_dims"]
    cdt = prepared["compute_dtype"]
    itemsize = jnp.dtype(cdt).itemsize

    B = x.shape[0]
    if batch_tile is None:
        # Single grid step for small/medium batches; 256-row MXU-friendly tiles for large batches
        # (>= 2 steps so both TensorCores get a share of the "parallel" batch axis on v7x).
        batch_tile = _round_up(B, _SUBLANE) if B <= 512 else 256
    Bp = _round_up(B, batch_tile)

    # Only the activation is padded per call, and only when actually needed (no-copy fast path).
    if Bp == B and Dinp == Din and x.dtype == jnp.dtype(cdt):
        xp = x
    else:
        xp = jnp.zeros((Bp, Dinp), cdt).at[:B, :Din].set(x.astype(cdt))

    grid = (Bp // batch_tile,)

    # --- explicit VMEM budget (x/out tiles are double-buffered by the pipeline; weights resident) ---
    weight_bytes = (Dinp * H1p + H1p * H2p + H2p * Doutp) * itemsize
    bias_bytes = (H1p + H2p + Doutp) * 4
    act_bytes = batch_tile * (Dinp * itemsize + Doutp * 4)
    interm_bytes = 4 * batch_tile * max(H1p, H2p)  # f32 hidden activations
    need = 2 * (weight_bytes + bias_bytes + act_bytes) + 2 * interm_bytes
    vmem_limit = None
    if need > _DEFAULT_SCOPED_VMEM:
        vmem_limit = min(_round_up(need + (4 << 20), 1 << 20), _MAX_VMEM_LIMIT)

    # --- cost estimate so XLA schedules the custom call sensibly ---
    flops = 2 * Bp * (Dinp * H1p + H1p * H2p + H2p * Doutp)
    transcendentals = Bp * (H1p + H2p + 2 * Doutp)  # sigmoid exp per hidden unit, exp+log1p at output
    bytes_accessed = Bp * Dinp * itemsize + weight_bytes + bias_bytes + Bp * Doutp * 4

    out = pl.pallas_call(
        mlp_kernel,
        out_shape=jax.ShapeDtypeStruct((Bp, Doutp), jnp.float32),
        grid_spec=pltpu.PrefetchScalarGridSpec(
            num_scalar_prefetch=0,
            grid=grid,
            in_specs=[
                pl.BlockSpec((batch_tile, Dinp), lambda i: (i, 0)),  # x tile
                pl.BlockSpec((Dinp, H1p), lambda i: (0, 0)),         # W1 (resident)
                pl.BlockSpec((1, H1p), lambda i: (0, 0)),            # b1
                pl.BlockSpec((H1p, H2p), lambda i: (0, 0)),          # W2 (resident)
                pl.BlockSpec((1, H2p), lambda i: (0, 0)),            # b2
                pl.BlockSpec((H2p, Doutp), lambda i: (0, 0)),        # W3 (resident)
                pl.BlockSpec((1, Doutp), lambda i: (0, 0)),          # b3
            ],
            out_specs=pl.BlockSpec((batch_tile, Doutp), lambda i: (i, 0)),
        ),
        compiler_params=pltpu.CompilerParams(
            dimension_semantics=("parallel",),
            vmem_limit_bytes=vmem_limit,
        ),
        cost_estimate=pl.CostEstimate(
            flops=flops, transcendentals=transcendentals, bytes_accessed=bytes_accessed
        ),
    )(xp, prepared["w1"], prepared["b1"], prepared["w2"], prepared["b2"],
      prepared["w3"], prepared["b3"])

    return out[:B, :Dout]


def init_params(key, in_dim, layers, out_features):
    """Deterministic init mimicking nn.Linear default (uniform +/- 1/sqrt(fan_in))."""
    params = {}
    dims = [in_dim] + list(layers) + [out_features]
    names = ["l1", "l2", "l3"]
    for name, fan_in, fan_out in zip(names, dims[:-1], dims[1:]):
        key, kw, kb = jax.random.split(key, 3)
        bound = 1.0 / jnp.sqrt(fan_in)
        W = jax.random.uniform(kw, (fan_out, fan_in), jnp.float32, -bound, bound)
        b = jax.random.uniform(kb, (fan_out,), jnp.float32, -bound, bound)
        params[name] = (W, b)
    return params


def reference_forward(x, params):
    (w1, b1), (w2, b2), (w3, b3) = params["l1"], params["l2"], params["l3"]
    h = _swish(x @ w1.T + b1)
    h = _swish(h @ w2.T + b2)
    return _softplus(h @ w3.T + b3)


if __name__ == "__main__":
    # Small shapes consistent with the module: in_dim=(16,), layers=(32, 32), out_dim=(3, 2).
    batch = 8
    in_dim = (16,)
    layers = (32, 32)
    out_dim = (3, 2)
    out_features = out_dim[0] * out_dim[1]

    key = jax.random.PRNGKey(0)
    key, kx = jax.random.split(key)
    x = jax.random.normal(kx, (batch, in_dim[0]), jnp.float32)

    params = init_params(key, in_dim[0], layers, out_features)

    # Weight transpose + padding hoisted out of the per-call path (done once).
    # Use compute_dtype=jnp.bfloat16 for ~2x MXU throughput / half the weight DMA when the
    # 1e-5 f32 reference tolerance isn't required.
    prepared = prepare_params(params, compute_dtype=jnp.float32)

    y = feedforward_nn_pallas(x, prepared)
    y = jax.block_until_ready(y)

    y_ref = reference_forward(x, params)
    assert y.shape == (batch, out_features), y.shape
    assert jnp.allclose(y, y_ref, atol=1e-5, rtol=1e-5), float(jnp.max(jnp.abs(y - y_ref)))

    print("KERNEL_OK")
</pallas_src>

<mosaic_0001>
module attributes {stable_mosaic.version = 11 : i64} {
  func.func @mlp_kernel(%arg0: i32, %arg1: memref<8x128xf32, #tpu.memory_space<vmem>>, %arg2: memref<128x128xf32, #tpu.memory_space<vmem>>, %arg3: memref<1x128xf32, #tpu.memory_space<vmem>>, %arg4: memref<128x128xf32, #tpu.memory_space<vmem>>, %arg5: memref<1x128xf32, #tpu.memory_space<vmem>>, %arg6: memref<128x128xf32, #tpu.memory_space<vmem>>, %arg7: memref<1x128xf32, #tpu.memory_space<vmem>>, %arg8: memref<8x128xf32, #tpu.memory_space<vmem>>) attributes {dimension_semantics = [#tpu.dimension_semantics<parallel>], iteration_bounds = array<i64: 1>, scalar_prefetch = 0 : i64, scratch_operands = 0 : i64, tpu.core_type = #tpu.core_type<tc>, window_params = [{transform_indices = @transform_0, window_bounds = array<i64: 8, 128>}, {pipeline_mode = #tpu.pipeline_mode<synchronous>, transform_indices = @transform_1, window_bounds = array<i64: 128, 128>}, {pipeline_mode = #tpu.pipeline_mode<synchronous>, transform_indices = @transform_2, window_bounds = array<i64: 1, 128>}, {pipeline_mode = #tpu.pipeline_mode<synchronous>, transform_indices = @transform_3, window_bounds = array<i64: 128, 128>}, {pipeline_mode = #tpu.pipeline_mode<synchronous>, transform_indices = @transform_4, window_bounds = array<i64: 1, 128>}, {pipeline_mode = #tpu.pipeline_mode<synchronous>, transform_indices = @transform_5, window_bounds = array<i64: 128, 128>}, {pipeline_mode = #tpu.pipeline_mode<synchronous>, transform_indices = @transform_6, window_bounds = array<i64: 1, 128>}, {transform_indices = @transform_7, window_bounds = array<i64: 8, 128>}]} {
    %c0 = arith.constant 0 : index
    %c0_0 = arith.constant 0 : index
    %0 = vector.load %arg1[%c0, %c0_0] : memref<8x128xf32, #tpu.memory_space<vmem>>, vector<8x128xf32>
    %c0_1 = arith.constant 0 : index
    %c0_2 = arith.constant 0 : index
    %1 = vector.load %arg2[%c0_1, %c0_2] : memref<128x128xf32, #tpu.memory_space<vmem>>, vector<128x128xf32>
    %cst = arith.constant dense<0.000000e+00> : vector<8x128xf32>
    %2 = tpu.matmul %0, %1, %cst {dimension_numbers = #tpu.dot_dimension_numbers<[1], [0], [0], [1], [0, 0, 1, 1], [], []>} : vector<8x128xf32>, vector<128x128xf32>, vector<8x128xf32> -> vector<8x128xf32>
    %c0_3 = arith.constant 0 : index
    %c0_4 = arith.constant 0 : index
    %3 = vector.load %arg3[%c0_3, %c0_4] : memref<1x128xf32, #tpu.memory_space<vmem>>, vector<1x128xf32>
    %4 = vector.broadcast %3 : vector<1x128xf32> to vector<8x128xf32>
    %5 = arith.addf %2, %4 : vector<8x128xf32>
    %6 = arith.negf %5 : vector<8x128xf32>
    %7 = math.exp %6 : vector<8x128xf32>
    %cst_5 = arith.constant 1.000000e+00 : f32
    %8 = vector.broadcast %cst_5 : f32 to vector<8x128xf32>
    %9 = arith.addf %8, %7 : vector<8x128xf32>
    %10 = arith.divf %8, %9 : vector<8x128xf32>
    %11 = arith.mulf %5, %10 : vector<8x128xf32>
    %c0_6 = arith.constant 0 : index
    %c0_7 = arith.constant 0 : index
    %12 = vector.load %arg4[%c0_6, %c0_7] : memref<128x128xf32, #tpu.memory_space<vmem>>, vector<128x128xf32>
    %cst_8 = arith.constant dense<0.000000e+00> : vector<8x128xf32>
    %13 = tpu.matmul %11, %12, %cst_8 {dimension_numbers = #tpu.dot_dimension_numbers<[1], [0], [0], [1], [0, 0, 1, 1], [], []>} : vector<8x128xf32>, vector<128x128xf32>, vector<8x128xf32> -> vector<8x128xf32>
    %c0_9 = arith.constant 0 : index
    %c0_10 = arith.constant 0 : index
    %14 = vector.load %arg5[%c0_9, %c0_10] : memref<1x128xf32, #tpu.memory_space<vmem>>, vector<1x128xf32>
    %15 = vector.broadcast %14 : vector<1x128xf32> to vector<8x128xf32>
    %16 = arith.addf %13, %15 : vector<8x128xf32>
    %17 = arith.negf %16 : vector<8x128xf32>
    %18 = math.exp %17 : vector<8x128xf32>
    %cst_11 = arith.constant 1.000000e+00 : f32
    %19 = vector.broadcast %cst_11 : f32 to vector<8x128xf32>
    %20 = arith.addf %19, %18 : vector<8x128xf32>
    %21 = arith.divf %19, %20 : vector<8x128xf32>
    %22 = arith.mulf %16, %21 : vector<8x128xf32>
    %c0_12 = arith.constant 0 : index
    %c0_13 = arith.constant 0 : index
    %23 = vector.load %arg6[%c0_12, %c0_13] : memref<128x128xf32, #tpu.memory_space<vmem>>, vector<128x128xf32>
    %cst_14 = arith.constant dense<0.000000e+00> : vector<8x128xf32>
    %24 = tpu.matmul %22, %23, %cst_14 {dimension_numbers = #tpu.dot_dimension_numbers<[1], [0], [0], [1], [0, 0, 1, 1], [], []>} : vector<8x128xf32>, vector<128x128xf32>, vector<8x128xf32> -> vector<8x128xf32>
    %c0_15 = arith.constant 0 : index
    %c0_16 = arith.constant 0 : index
    %25 = vector.load %arg7[%c0_15, %c0_16] : memref<1x128xf32, #tpu.memory_space<vmem>>, vector<1x128xf32>
    %26 = vector.broadcast %25 : vector<1x128xf32> to vector<8x128xf32>
    %27 = arith.addf %24, %26 : vector<8x128xf32>
    %cst_17 = arith.constant 0.000000e+00 : f32
    %28 = vector.broadcast %cst_17 : f32 to vector<8x128xf32>
    %29 = arith.maximumf %27, %28 : vector<8x128xf32>
    %30 = math.absf %27 : vector<8x128xf32>
    %cst_18 = arith.constant 0.000000e+00 : f32
    %31 = vector.broadcast %cst_18 : f32 to vector<8x128xf32>
    %32 = arith.subf %31, %30 : vector<8x128xf32>
    %33 = math.exp %32 : vector<8x128xf32>
    %34 = math.log1p %33 : vector<8x128xf32>
    %35 = arith.addf %29, %34 : vector<8x128xf32>
    %cst_19 = arith.constant 2.000000e+01 : f32
    %36 = vector.broadcast %cst_19 : f32 to vector<8x128xf32>
    %37 = arith.cmpf ogt, %27, %36 : vector<8x128xf32>
    %38 = arith.select %37, %27, %35 : vector<8x128xi1>, vector<8x128xf32>
    %c0_20 = arith.constant 0 : index
    %c0_21 = arith.constant 0 : index
    %39 = vector.load %arg8[%c0_20, %c0_21] : memref<8x128xf32, #tpu.memory_space<vmem>>, vector<8x128xf32>
    tpu.vector_store %arg8[%c0_20, %c0_21], %38 {strides = array<i32>} : memref<8x128xf32, #tpu.memory_space<vmem>>, vector<8x128xf32>,
    return
  }
  func.func @transform_0(%arg0: i32) -> (i32, i32) {
    %c0_i32 = arith.constant 0 : i32
    %c0_i32_0 = arith.constant 0 : i32
    return %arg0, %c0_i32 : i32, i32
  }
  func.func @transform_1(%arg0: i32) -> (i32, i32) {
    %c0_i32 = arith.constant 0 : i32
    %c0_i32_0 = arith.constant 0 : i32
    %c0_i32_1 = arith.constant 0 : i32
    return %c0_i32, %c0_i32_0 : i32, i32
  }
  func.func @transform_2(%arg0: i32) -> (i32, i32) {
    %c0_i32 = arith.constant 0 : i32
    %c0_i32_0 = arith.constant 0 : i32
    %c0_i32_1 = arith.constant 0 : i32
    return %c0_i32, %c0_i32_0 : i32, i32
  }
  func.func @transform_3(%arg0: i32) -> (i32, i32) {
    %c0_i32 = arith.constant 0 : i32
    %c0_i32_0 = arith.constant 0 : i32
    %c0_i32_1 = arith.constant 0 : i32
    return %c0_i32, %c0_i32_0 : i32, i32
  }
  func.func @transform_4(%arg0: i32) -> (i32, i32) {
    %c0_i32 = arith.constant 0 : i32
    %c0_i32_0 = arith.constant 0 : i32
    %c0_i32_1 = arith.constant 0 : i32
    return %c0_i32, %c0_i32_0 : i32, i32
  }
  func.func @transform_5(%arg0: i32) -> (i32, i32) {
    %c0_i32 = arith.constant 0 : i32
    %c0_i32_0 = arith.constant 0 : i32
    %c0_i32_1 = arith.constant 0 : i32
    return %c0_i32, %c0_i32_0 : i32, i32
  }
  func.func @transform_6(%arg0: i32) -> (i32, i32) {
    %c0_i32 = arith.constant 0 : i32
    %c0_i32_0 = arith.constant 0 : i32
    %c0_i32_1 = arith.constant 0 : i32
    return %c0_i32, %c0_i32_0 : i32, i32
  }
  func.func @transform_7(%arg0: i32) -> (i32, i32) {
    %c0_i32 = arith.constant 0 : i32
    %c0_i32_0 = arith.constant 0 : i32
    return %arg0, %c0_i32 : i32, i32
  }
}

</mosaic_0001>

<llo_original>
// kernel: tpu_custom_call.1
$region0: #{tpu_custom_call.1}
  #allocation0 [shape = 'u32[]', space=smem, size = 0x4, offset = 0x4, fixed_abs, tag = 'smem constant byte address 0x4 - core index']
  #allocation1 [shape = 'u32[144,128]{1,0:T(1,128)}', space=vmem, size = 0x12000, scoped, tag = 'internal scratch']
  %s0 = inlined_call_operand.hbm [shape: f32[8,128], index: 0, kind: input, shape index: {}]
  %s1 = inlined_call_operand.hbm [shape: f32[128,128], index: 1, kind: input, shape index: {}]
  %s2 = inlined_call_operand.vmem [shape: f32[1,128], index: 2, kind: input, shape index: {}]
  %s3 = inlined_call_operand.hbm [shape: f32[128,128], index: 3, kind: input, shape index: {}]
  %s4 = inlined_call_operand.vmem [shape: f32[1,128], index: 4, kind: input, shape index: {}]
  %s5 = inlined_call_operand.hbm [shape: f32[128,128], index: 5, kind: input, shape index: {}]
  %s6 = inlined_call_operand.vmem [shape: f32[1,128], index: 6, kind: input, shape index: {}]
  %s7 = inlined_call_operand.hbm [shape: f32[8,128], index: 7, kind: output, shape index: {}]
  %s8 = sld [smem:[#allocation0]]
  $region54: #{tpu_custom_call.1} parent=0
    _
  %s10 = ssub.s32 1, %s8
  %s11 = scalar_select 0, %s10, %s8
  $region1: #{tpu_custom_call.1} parent=0
    #allocation2 [shape = 'u8[4096]{0}', space=vmem, size = 0x1000, scoped, tag = 'input window, operand 0, single buffered']
    #allocation3 [shape = 's32[1]{0}', space=sflag, size = 0x4, scoped, tag = 'scoped memory for tpu_custom_call.1']
    #allocation4 [shape = 's32[1]{0}', space=sflag, size = 0x4, scoped, tag = 'scoped memory for tpu_custom_call.1']
    #allocation5 [shape = 'u8[65536]{0}', space=vmem, size = 0x10000, scoped, tag = 'input window, operand 1, single buffered']
    #allocation6 [shape = 's32[1]{0}', space=sflag, size = 0x4, scoped, tag = 'scoped memory for tpu_custom_call.1']
    #allocation7 [shape = 'u8[65536]{0}', space=vmem, size = 0x10000, scoped, tag = 'input window, operand 3, single buffered']
    #allocation8 [shape = 'u8[65536]{0}', space=vmem, size = 0x10000, scoped, tag = 'input window, operand 5, single buffered']
    #allocation9 [shape = 's32[1]{0}', space=sflag, size = 0x4, scoped, tag = 'scoped memory for tpu_custom_call.1']
    #allocation10 [shape = 'u8[4096]{0}', space=vmem, size = 0x1000, scoped, tag = 'output window, operand 0, single buffered']
    %12 = vsyncpa [#allocation3], 0
    %13 = vsyncpa [#allocation6], 0
    %14 = vsyncpa [#allocation9], 0
    %15 = vsyncpa [#allocation4], 0
    // Predicated region
    $region2: #{tpu_custom_call.1} parent=1 // pred_check
      _
    $region3: #{tpu_custom_call.1} parent=1 // pred_check_branch
      %17 = sbr.rel (0) target = $region5
    $region4: #{tpu_custom_call.1} parent=1 // pred_region
      %s19 = ssub.s32 128, 128
      %20 = vsyncadd [#allocation3], %s19
      %s22 = sshll.u32 [#allocation2], 4
      %s23 = int_to_ptr.vmem [resolvable:$true] %s22
      %25 = dma.hbm_to_vmem [thread:$0]  %s0, 128, %s23, [#allocation3]
    $region5: #{tpu_custom_call.1} parent=1 // pred_fallthru
      _
    // Predicated region
    $region6: #{tpu_custom_call.1} parent=1 // pred_check
      _
    $region7: #{tpu_custom_call.1} parent=1 // pred_check_branch
      %27 = sbr.rel (0) target = $region9
    $region8: #{tpu_custom_call.1} parent=1 // pred_region
      %s29 = ssub.s32 2048, 2048
      %30 = vsyncadd [#allocation6], %s29
      %s31 = sshll.u32 [#allocation5], 4
      %s32 = int_to_ptr.vmem [resolvable:$true] %s31
      %37 = dma.hbm_to_vmem [thread:$0]  %s1, 2048, %s32, [#allocation6], 128, 128, 8
    $region9: #{tpu_custom_call.1} parent=1 // pred_fallthru
      _
    // Predicated region
    $region10: #{tpu_custom_call.1} parent=1 // pred_check
      _
    $region11: #{tpu_custom_call.1} parent=1 // pred_check_branch
      %39 = sbr.rel (0) target = $region13
    $region12: #{tpu_custom_call.1} parent=1 // pred_region
      _
    $region13: #{tpu_custom_call.1} parent=1 // pred_fallthru
      _
    // Predicated region
    $region14: #{tpu_custom_call.1} parent=1 // pred_check
      _
    $region15: #{tpu_custom_call.1} parent=1 // pred_check_branch
      %41 = sbr.rel (0) target = $region17
    $region16: #{tpu_custom_call.1} parent=1 // pred_region
      %s43 = ssub.s32 2048, 2048
      %44 = vsyncadd [#allocation6], %s43
      %s45 = sshll.u32 [#allocation7], 4
      %s46 = int_to_ptr.vmem [resolvable:$true] %s45
      %51 = dma.hbm_to_vmem [thread:$0]  %s3, 2048, %s46, [#allocation6], 128, 128, 8
    $region17: #{tpu_custom_call.1} parent=1 // pred_fallthru
      _
    // Predicated region
    $region18: #{tpu_custom_call.1} parent=1 // pred_check
      _
    $region19: #{tpu_custom_call.1} parent=1 // pred_check_branch
      %53 = sbr.rel (0) target = $region21
    $region20: #{tpu_custom_call.1} parent=1 // pred_region
      _
    $region21: #{tpu_custom_call.1} parent=1 // pred_fallthru
      _
    // Predicated region
    $region22: #{tpu_custom_call.1} parent=1 // pred_check
      _
    $region23: #{tpu_custom_call.1} parent=1 // pred_check_branch
      %55 = sbr.rel (0) target = $region25
    $region24: #{tpu_custom_call.1} parent=1 // pred_region
      %s57 = ssub.s32 2048, 2048
      %58 = vsyncadd [#allocation9], %s57
      %s59 = sshll.u32 [#allocation8], 4
      %s60 = int_to_ptr.vmem [resolvable:$true] %s59
      %65 = dma.hbm_to_vmem [thread:$0]  %s5, 2048, %s60, [#allocation9], 128, 128, 8
    $region25: #{tpu_custom_call.1} parent=1 // pred_fallthru
      _
    // Predicated region
    $region26: #{tpu_custom_call.1} parent=1 // pred_check
      _
    $region27: #{tpu_custom_call.1} parent=1 // pred_check_branch
      %67 = sbr.rel (0) target = $region29
    $region28: #{tpu_custom_call.1} parent=1 // pred_region
      _
    $region29: #{tpu_custom_call.1} parent=1 // pred_fallthru
      _
    // Predicated region
    $region30: #{tpu_custom_call.1} parent=1 // pred_check
      _
    $region31: #{tpu_custom_call.1} parent=1 // pred_check_branch
      %69 = sbr.rel (0) target = $region33
    $region32: #{tpu_custom_call.1} parent=1 // pred_region
      %70 = dma.done [#allocation3], 128
    $region33: #{tpu_custom_call.1} parent=1 // pred_fallthru
      _
    // Predicated region
    $region34: #{tpu_custom_call.1} parent=1 // pred_check
      _
    $region35: #{tpu_custom_call.1} parent=1 // pred_check_branch
      %72 = sbr.rel (0) target = $region37
    $region36: #{tpu_custom_call.1} parent=1 // pred_region
      %73 = dma.done [#allocation6], 2048
    $region37: #{tpu_custom_call.1} parent=1 // pred_fallthru
      _
    // Predicated region
    $region38: #{tpu_custom_call.1} parent=1 // pred_check
      _
    $region39: #{tpu_custom_call.1} parent=1 // pred_check_branch
      %75 = sbr.rel (0) target = $region41
    $region40: #{tpu_custom_call.1} parent=1 // pred_region
      %76 = dma.done [#allocation6], 2048
    $region41: #{tpu_custom_call.1} parent=1 // pred_fallthru
      _
    // Predicated region
    $region42: #{tpu_custom_call.1} parent=1 // pred_check
      _
    $region43: #{tpu_custom_call.1} parent=1 // pred_check_branch
      %78 = sbr.rel (0) target = $region45
    $region44: #{tpu_custom_call.1} parent=1 // pred_region
      %79 = dma.done [#allocation9], 2048
    $region45: #{tpu_custom_call.1} parent=1 // pred_fallthru
      _
    %v80 = vld [vmem:[#allocation2] sm:$0xff]
    %v81 = vld [vmem:[#allocation5] sm:$0xff]
    %v82 = vld [vmem:[#allocation5 + $0x8] sm:$0xff]
    %v83 = vld [vmem:[#allocation5 + $0x10] sm:$0xff]
    %v84 = vld [vmem:[#allocation5 + $0x18] sm:$0xff]
    %v85 = vld [vmem:[#allocation5 + $0x20] sm:$0xff]
    %v86 = vld [vmem:[#allocation5 + $0x28] sm:$0xff]
    %v87 = vld [vmem:[#allocation5 + $0x30] sm:$0xff]
    %v88 = vld [vmem:[#allocation5 + $0x38] sm:$0xff]
    %v89 = vld [vmem:[#allocation5 + $0x40] sm:$0xff]
    %v90 = vld [vmem:[#allocation5 + $0x48] sm:$0xff]
    %v91 = vld [vmem:[#allocation5 + $0x50] sm:$0xff]
    %v92 = vld [vmem:[#allocation5 + $0x58] sm:$0xff]
    %v93 = vld [vmem:[#allocation5 + $0x60] sm:$0xff]
    %v94 = vld [vmem:[#allocation5 + $0x68] sm:$0xff]
    %v95 = vld [vmem:[#allocation5 + $0x70] sm:$0xff]
    %v96 = vld [vmem:[#allocation5 + $0x78] sm:$0xff]
    %v97 = vld [vmem:[%s2] sm:$0x1]
    %v99 = vlaneseq
    %v100 = vshrl.u32 %v99, 7
    %v101 = vsub.s32 0, %v100
    %v102 = vrot.slane %v97, %v101
    %104 = vmatprep.subr.mxu0 0.0
    %105 = vmatpush1.msra.mxu0 %v96
    %106 = vmatprep.subr.mxu0 0.0
    %107 = vmatpush1.msra.mxu0 %v95
    %108 = vmatprep.subr.mxu0 0.0
    %109 = vmatpush1.msra.mxu0 %v94
    %110 = vmatprep.subr.mxu0 0.0
    %111 = vmatpush1.msra.mxu0 %v93
    %112 = vmatprep.subr.mxu0 0.0
    %113 = vmatpush1.msra.mxu0 %v92
    %114 = vmatprep.subr.mxu0 0.0
    %115 = vmatpush1.msra.mxu0 %v91
    %116 = vmatprep.subr.mxu0 0.0
    %117 = vmatpush1.msra.mxu0 %v90
    %118 = vmatprep.subr.mxu0 0.0
    %119 = vmatpush1.msra.mxu0 %v89
    %120 = vmatprep.subr.mxu0 0.0
    %121 = vmatpush1.msra.mxu0 %v88
    %122 = vmatprep.subr.mxu0 0.0
    %123 = vmatpush1.msra.mxu0 %v87
    %124 = vmatprep.subr.mxu0 0.0
    %125 = vmatpush1.msra.mxu0 %v86
    %126 = vmatprep.subr.mxu0 0.0
    %127 = vmatpush1.msra.mxu0 %v85
    %128 = vmatprep.subr.mxu0 0.0
    %129 = vmatpush1.msra.mxu0 %v84
    %130 = vmatprep.subr.mxu0 0.0
    %131 = vmatpush1.msra.mxu0 %v83
    %132 = vmatprep.subr.mxu0 0.0
    %133 = vmatpush1.msra.mxu0 %v82
    %134 = vmatprep.subr.mxu0 0.0
    %135 = vmatpush1.msra.mxu0 %v81
    %136 = vmatprep.subr.mxu0 0.0
    %137 = vmatpush2.msra.mxu0 0.0
    %138 = vmatprep.subr.mxu0 0.0
    %139 = vmatpush2.msra.mxu0 0.0
    %140 = vmatprep.subr.mxu0 0.0
    %141 = vmatpush2.msra.mxu0 0.0
    %142 = vmatprep.subr.mxu0 0.0
    %143 = vmatpush2.msra.mxu0 0.0
    %144 = vmatprep.subr.mxu0 0.0
    %145 = vmatpush2.msra.mxu0 0.0
    %146 = vmatprep.subr.mxu0 0.0
    %147 = vmatpush2.msra.mxu0 0.0
    %148 = vmatprep.subr.mxu0 0.0
    %149 = vmatpush2.msra.mxu0 0.0
    %150 = vmatprep.subr.mxu0 0.0
    %151 = vmatpush2.msra.mxu0 0.0
    %152 = vmatprep.subr.mxu0 0.0
    %153 = vmatpush2.msra.mxu0 0.0
    %154 = vmatprep.subr.mxu0 0.0
    %155 = vmatpush2.msra.mxu0 0.0
    %156 = vmatprep.subr.mxu0 0.0
    %157 = vmatpush2.msra.mxu0 0.0
    %158 = vmatprep.subr.mxu0 0.0
    %159 = vmatpush2.msra.mxu0 0.0
    %160 = vmatprep.subr.mxu0 0.0
    %161 = vmatpush2.msra.mxu0 0.0
    %162 = vmatprep.subr.mxu0 0.0
    %163 = vmatpush2.msra.mxu0 0.0
    %164 = vmatprep.subr.mxu0 0.0
    %165 = vmatpush2.msra.mxu0 0.0
    %166 = vmatprep.subr.mxu0 0.0
    %167 = vmatpush2.msra.mxu0 0.0
    %168 = vmatprep.mubr.f32.mxu0 0.0
    %169 = vmatmul.mubr.f32.gmra.mxu0 %v80
    %v170 = vpop.f32.mrf.mxu0
    %v171 = vadd.f32 %v102, %v170
    %v172 = vpop.f32.mrf.mxu0
    %173 = vdwg.mxu0
    %v174 = vxor.u32 %v171, 2147483648
    %v175 = vmul.f32 %v174, 1.442695
    %v176 = vpow.pop %v175
    %v177 = vadd.f32 %v176, 1.0
    %v178 = vrcp.pop %v177
    %v179 = vmul.f32 1.0, %v178
    %v180 = vmul.f32 %v171, %v179
    %v181 = vld [vmem:[#allocation7] sm:$0xff]
    %v182 = vld [vmem:[#allocation7 + $0x8] sm:$0xff]
    %v183 = vld [vmem:[#allocation7 + $0x10] sm:$0xff]
    %v184 = vld [vmem:[#allocation7 + $0x18] sm:$0xff]
    %v185 = vld [vmem:[#allocation7 + $0x20] sm:$0xff]
    %v186 = vld [vmem:[#allocation7 + $0x28] sm:$0xff]
    %v187 = vld [vmem:[#allocation7 + $0x30] sm:$0xff]
    %v188 = vld [vmem:[#allocation7 + $0x38] sm:$0xff]
    %v189 = vld [vmem:[#allocation7 + $0x40] sm:$0xff]
    %v190 = vld [vmem:[#allocation7 + $0x48] sm:$0xff]
    %v191 = vld [vmem:[#allocation7 + $0x50] sm:$0xff]
    %v192 = vld [vmem:[#allocation7 + $0x58] sm:$0xff]
    %v193 = vld [vmem:[#allocation7 + $0x60] sm:$0xff]
    %v194 = vld [vmem:[#allocation7 + $0x68] sm:$0xff]
    %v195 = vld [vmem:[#allocation7 + $0x70] sm:$0xff]
    %v196 = vld [vmem:[#allocation7 + $0x78] sm:$0xff]
    %v197 = vld [vmem:[%s4] sm:$0x1]
    %v199 = vlaneseq
    %v200 = vshrl.u32 %v199, 7
    %v201 = vsub.s32 0, %v200
    %v202 = vrot.slane %v197, %v201
    %204 = vmatprep.subr.mxu0 0.0
    %205 = vmatpush1.msra.mxu0 %v196
    %206 = vmatprep.subr.mxu0 0.0
    %207 = vmatpush1.msra.mxu0 %v195
    %208 = vmatprep.subr.mxu0 0.0
    %209 = vmatpush1.msra.mxu0 %v194
    %210 = vmatprep.subr.mxu0 0.0
    %211 = vmatpush1.msra.mxu0 %v193
    %212 = vmatprep.subr.mxu0 0.0
    %213 = vmatpush1.msra.mxu0 %v192
    %214 = vmatprep.subr.mxu0 0.0
    %215 = vmatpush1.msra.mxu0 %v191
    %216 = vmatprep.subr.mxu0 0.0
    %217 = vmatpush1.msra.mxu0 %v190
    %218 = vmatprep.subr.mxu0 0.0
    %219 = vmatpush1.msra.mxu0 %v189
    %220 = vmatprep.subr.mxu0 0.0
    %221 = vmatpush1.msra.mxu0 %v188
    %222 = vmatprep.subr.mxu0 0.0
    %223 = vmatpush1.msra.mxu0 %v187
    %224 = vmatprep.subr.mxu0 0.0
    %225 = vmatpush1.msra.mxu0 %v186
    %226 = vmatprep.subr.mxu0 0.0
    %227 = vmatpush1.msra.mxu0 %v185
    %228 = vmatprep.subr.mxu0 0.0
    %229 = vmatpush1.msra.mxu0 %v184
    %230 = vmatprep.subr.mxu0 0.0
    %231 = vmatpush1.msra.mxu0 %v183
    %232 = vmatprep.subr.mxu0 0.0
    %233 = vmatpush1.msra.mxu0 %v182
    %234 = vmatprep.subr.mxu0 0.0
    %235 = vmatpush1.msra.mxu0 %v181
    %236 = vmatprep.subr.mxu0 0.0
    %237 = vmatpush2.msra.mxu0 0.0
    %238 = vmatprep.subr.mxu0 0.0
    %239 = vmatpush2.msra.mxu0 0.0
    %240 = vmatprep.subr.mxu0 0.0
    %241 = vmatpush2.msra.mxu0 0.0
    %242 = vmatprep.subr.mxu0 0.0
    %243 = vmatpush2.msra.mxu0 0.0
    %244 = vmatprep.subr.mxu0 0.0
    %245 = vmatpush2.msra.mxu0 0.0
    %246 = vmatprep.subr.mxu0 0.0
    %247 = vmatpush2.msra.mxu0 0.0
    %248 = vmatprep.subr.mxu0 0.0
    %249 = vmatpush2.msra.mxu0 0.0
    %250 = vmatprep.subr.mxu0 0.0
    %251 = vmatpush2.msra.mxu0 0.0
    %252 = vmatprep.subr.mxu0 0.0
    %253 = vmatpush2.msra.mxu0 0.0
    %254 = vmatprep.subr.mxu0 0.0
    %255 = vmatpush2.msra.mxu0 0.0
    %256 = vmatprep.subr.mxu0 0.0
    %257 = vmatpush2.msra.mxu0 0.0
    %258 = vmatprep.subr.mxu0 0.0
    %259 = vmatpush2.msra.mxu0 0.0
    %260 = vmatprep.subr.mxu0 0.0
    %261 = vmatpush2.msra.mxu0 0.0
    %262 = vmatprep.subr.mxu0 0.0
    %263 = vmatpush2.msra.mxu0 0.0
    %264 = vmatprep.subr.mxu0 0.0
    %265 = vmatpush2.msra.mxu0 0.0
    %266 = vmatprep.subr.mxu0 0.0
    %267 = vmatpush2.msra.mxu0 0.0
    %268 = vmatprep.mubr.f32.mxu0 0.0
    %269 = vmatmul.mubr.f32.gmra.mxu0 %v180
    %v270 = vpop.f32.mrf.mxu0
    %v271 = vadd.f32 %v202, %v270
    %v272 = vpop.f32.mrf.mxu0
    %273 = vdwg.mxu0
    %v274 = vxor.u32 %v271, 2147483648
    %v275 = vmul.f32 %v274, 1.442695
    %v276 = vpow.pop %v275
    %v277 = vadd.f32 %v276, 1.0
    %v278 = vrcp.pop %v277
    %v279 = vmul.f32 1.0, %v278
    %v280 = vmul.f32 %v271, %v279
    %v281 = vld [vmem:[#allocation8] sm:$0xff]
    %v282 = vld [vmem:[#allocation8 + $0x8] sm:$0xff]
    %v283 = vld [vmem:[#allocation8 + $0x10] sm:$0xff]
    %v284 = vld [vmem:[#allocation8 + $0x18] sm:$0xff]
    %v285 = vld [vmem:[#allocation8 + $0x20] sm:$0xff]
    %v286 = vld [vmem:[#allocation8 + $0x28] sm:$0xff]
    %v287 = vld [vmem:[#allocation8 + $0x30] sm:$0xff]
    %v288 = vld [vmem:[#allocation8 + $0x38] sm:$0xff]
    %v289 = vld [vmem:[#allocation8 + $0x40] sm:$0xff]
    %v290 = vld [vmem:[#allocation8 + $0x48] sm:$0xff]
    %v291 = vld [vmem:[#allocation8 + $0x50] sm:$0xff]
    %v292 = vld [vmem:[#allocation8 + $0x58] sm:$0xff]
    %v293 = vld [vmem:[#allocation8 + $0x60] sm:$0xff]
    %v294 = vld [vmem:[#allocation8 + $0x68] sm:$0xff]
    %v295 = vld [vmem:[#allocation8 + $0x70] sm:$0xff]
    %v296 = vld [vmem:[#allocation8 + $0x78] sm:$0xff]
    %v297 = vld [vmem:[%s6] sm:$0x1]
    %v299 = vlaneseq
    %v300 = vshrl.u32 %v299, 7
    %v301 = vsub.s32 0, %v300
    %v302 = vrot.slane %v297, %v301
    %304 = vmatprep.subr.mxu0 0.0
    %305 = vmatpush1.msra.mxu0 %v296
    %306 = vmatprep.subr.mxu0 0.0
    %307 = vmatpush1.msra.mxu0 %v295
    %308 = vmatprep.subr.mxu0 0.0
    %309 = vmatpush1.msra.mxu0 %v294
    %310 = vmatprep.subr.mxu0 0.0
    %311 = vmatpush1.msra.mxu0 %v293
    %312 = vmatprep.subr.mxu0 0.0
    %313 = vmatpush1.msra.mxu0 %v292
    %314 = vmatprep.subr.mxu0 0.0
    %315 = vmatpush1.msra.mxu0 %v291
    %316 = vmatprep.subr.mxu0 0.0
    %317 = vmatpush1.msra.mxu0 %v290
    %318 = vmatprep.subr.mxu0 0.0
    %319 = vmatpush1.msra.mxu0 %v289
    %320 = vmatprep.subr.mxu0 0.0
    %321 = vmatpush1.msra.mxu0 %v288
    %322 = vmatprep.subr.mxu0 0.0
    %323 = vmatpush1.msra.mxu0 %v287
    %324 = vmatprep.subr.mxu0 0.0
    %325 = vmatpush1.msra.mxu0 %v286
    %326 = vmatprep.subr.mxu0 0.0
    %327 = vmatpush1.msra.mxu0 %v285
    %328 = vmatprep.subr.mxu0 0.0
    %329 = vmatpush1.msra.mxu0 %v284
    %330 = vmatprep.subr.mxu0 0.0
    %331 = vmatpush1.msra.mxu0 %v283
    %332 = vmatprep.subr.mxu0 0.0
    %333 = vmatpush1.msra.mxu0 %v282
    %334 = vmatprep.subr.mxu0 0.0
    %335 = vmatpush1.msra.mxu0 %v281
    %336 = vmatprep.subr.mxu0 0.0
    %337 = vmatpush2.msra.mxu0 0.0
    %338 = vmatprep.subr.mxu0 0.0
    %339 = vmatpush2.msra.mxu0 0.0
    %340 = vmatprep.subr.mxu0 0.0
    %341 = vmatpush2.msra.mxu0 0.0
    %342 = vmatprep.subr.mxu0 0.0
    %343 = vmatpush2.msra.mxu0 0.0
    %344 = vmatprep.subr.mxu0 0.0
    %345 = vmatpush2.msra.mxu0 0.0
    %346 = vmatprep.subr.mxu0 0.0
    %347 = vmatpush2.msra.mxu0 0.0
    %348 = vmatprep.subr.mxu0 0.0
    %349 = vmatpush2.msra.mxu0 0.0
    %350 = vmatprep.subr.mxu0 0.0
    %351 = vmatpush2.msra.mxu0 0.0
    %352 = vmatprep.subr.mxu0 0.0
    %353 = vmatpush2.msra.mxu0 0.0
    %354 = vmatprep.subr.mxu0 0.0
    %355 = vmatpush2.msra.mxu0 0.0
    %356 = vmatprep.subr.mxu0 0.0
    %357 = vmatpush2.msra.mxu0 0.0
    %358 = vmatprep.subr.mxu0 0.0
    %359 = vmatpush2.msra.mxu0 0.0
    %360 = vmatprep.subr.mxu0 0.0
    %361 = vmatpush2.msra.mxu0 0.0
    %362 = vmatprep.subr.mxu0 0.0
    %363 = vmatpush2.msra.mxu0 0.0
    %364 = vmatprep.subr.mxu0 0.0
    %365 = vmatpush2.msra.mxu0 0.0
    %366 = vmatprep.subr.mxu0 0.0
    %367 = vmatpush2.msra.mxu0 0.0
    %368 = vmatprep.mubr.f32.mxu0 0.0
    %369 = vmatmul.mubr.f32.gmra.mxu0 %v280
    %v370 = vpop.f32.mrf.mxu0
    %v371 = vadd.f32 %v302, %v370
    %v372 = vpop.f32.mrf.mxu0
    %373 = vdwg.mxu0
    %v374 = vmax.f32 %v371, 0.0
    %v375 = vand.u32 2147483647, %v371
    %v376 = vsub.f32 0.0, %v375
    %v377 = vmul.f32 %v376, 1.442695
    %v378 = vpow.pop %v377
    %v379 = vadd.f32 %v378, 1.0
    %v380 = vlog2.pop %v379
    %v381 = vmul.f32 %v380, 0.6931472
    %v382 = vmul.f32 -0.5, %v378
    %v383 = vadd.f32 %v382, 1.0
    %v384 = vmul.f32 %v383, %v378
    %v385 = vand.u32 2147483647, %v378
    %vm386 = vcmp.lt.f32.partialorder %v385, 0.0004427343
    %v387 = vsel %vm386, %v384, %v381
    %v388 = vadd.f32 %v374, %v387
    %vm389 = vcmp.gt.f32.partialorder %v371, 20.0
    %v390 = vsel %vm389, %v371, %v388
    %391 = vst [vmem:[#allocation10] sm:$0xff] %v390
    // Predicated region
    $region46: #{tpu_custom_call.1} parent=1 // pred_check
      _
    $region47: #{tpu_custom_call.1} parent=1 // pred_check_branch
      %393 = sbr.rel (0) target = $region49
    $region48: #{tpu_custom_call.1} parent=1 // pred_region
      %s395 = ssub.s32 128, 128
      %396 = vsyncadd [#allocation4], %s395
      %s398 = sshll.u32 [#allocation10], 4
      %s399 = int_to_ptr.vmem [resolvable:$true] %s398
      %401 = dma.vmem_to_hbm [thread:$0]  %s399, 128, %s7, [#allocation4]
    $region49: #{tpu_custom_call.1} parent=1 // pred_fallthru
      _
    // Predicated region
    $region50: #{tpu_custom_call.1} parent=1 // pred_check
      _
    $region51: #{tpu_custom_call.1} parent=1 // pred_check_branch
      %403 = sbr.rel (0) target = $region53
    $region52: #{tpu_custom_call.1} parent=1 // pred_region
      %404 = dma.done [#allocation4], 128
    $region53: #{tpu_custom_call.1} parent=1 // pred_fallthru
      _
    %405 = vsyncpa [#allocation3], 1
    %406 = vsyncpa [#allocation6], 1
    %407 = vsyncpa [#allocation9], 1
    %408 = vsyncpa [#allocation4], 1

</llo_original>
